<compile_context>
chip_gen: v7x
topology: tpu7x:2x2x1
jax: 0.10.0
libtpu: 0.0.40
codegen_flags: <defaults>
</compile_context>

<pallas_src>
import jax
import jax.numpy as jnp
from jax import lax
from jax.experimental import pallas as pl
from jax.experimental.pallas import tpu as pltpu


def _mlp_kernel(xT_ref,          # (CPT, D_in, CK)  sub-chunked, batch on lanes
                w1_ref, c1_ref,  # (H1, D_in), (H1, 1)   BN folded into W1'/c1
                w2_ref, c2_ref,  # (H2, H1),  (H2, 1)    BN folded into W2'/c2
                w3_ref, b3_ref,  # (1, H2),   (1, 1)
                o_ref):          # (CPT, 1, CK)  lane-dense output
    """Fused forward for one batch tile, looped over 128*k-lane sub-chunks.

    Per chunk:   h1 = relu(W1' @ x + c1)
                 h2 = relu(W2' @ h1 + c2)
                 y  = w3 @ h2 + b3
    Dropout is identity (eval mode).
    """
    cpt = xT_ref.shape[0]

    # Loop-invariant (tiny) operands held in vregs across the chunk loop.
    w1 = w1_ref[...]
    w2 = w2_ref[...]
    w3 = w3_ref[...]
    c1 = c1_ref[...]          # (H1, 1) f32 — broadcast along lanes in the add
    c2 = c2_ref[...]
    b3 = b3_ref[...]

    def compute(j):
        x = xT_ref[j]                                            # (D_in, CK)
        h1 = jnp.dot(w1, x, preferred_element_type=jnp.float32)  # (H1, CK) f32
        h1 = jnp.maximum(h1 + c1, 0.0).astype(w2.dtype)
        h2 = jnp.dot(w2, h1, preferred_element_type=jnp.float32)  # (H2, CK) f32
        h2 = jnp.maximum(h2 + c2, 0.0).astype(w3.dtype)
        y = jnp.dot(w3, h2, preferred_element_type=jnp.float32) + b3  # (1, CK)
        o_ref[j] = y.astype(o_ref.dtype)

    if cpt == 1:
        compute(0)
    else:
        def body(j, carry):
            compute(j)
            return carry
        lax.fori_loop(0, cpt, body, 0, unroll=(cpt <= 8))


def _round_up(v, m):
    return ((v + m - 1) // m) * m


def signal_combiner_forward(x, params, *, batch_tile=2048, chunk=512,
                            compute_dtype=jnp.bfloat16):
    """x: (B, input_dim) float32 -> (B,) float32.  Eval-mode forward."""
    B, D_in = x.shape
    H1 = params["w1"].shape[1]
    H2 = params["w2"].shape[1]
    eps = 1e-5

    # Fold BatchNorm1d (eval mode / running stats) into weights + merged biases.
    s1 = params["bn1_gamma"] * lax.rsqrt(params["bn1_var"] + eps)
    t1 = params["bn1_beta"] - params["bn1_mean"] * s1
    s2 = params["bn2_gamma"] * lax.rsqrt(params["bn2_var"] + eps)
    t2 = params["bn2_beta"] - params["bn2_mean"] * s2

    # Feature-major weights: rows = output features, columns = input features.
    w1t = (params["w1"].T * s1[:, None]).astype(compute_dtype)   # (H1, D_in)
    c1 = (params["b1"] * s1 + t1).reshape(H1, 1).astype(jnp.float32)
    w2t = (params["w2"].T * s2[:, None]).astype(compute_dtype)   # (H2, H1)
    c2 = (params["b2"] * s2 + t2).reshape(H2, 1).astype(jnp.float32)
    w3t = params["w3"].T.astype(compute_dtype)                   # (1, H2)
    b3 = params["b3"].reshape(1, 1).astype(jnp.float32)

    # ---- batch tiling -------------------------------------------------------
    # Large lane-dense tile (multiple of 128), clamped so the grid has >= 2
    # steps whenever B allows it (v7x dual-TC / megacore sharding).
    tile = max(128, (int(batch_tile) // 128) * 128)
    tile = min(tile, max(128, _round_up((B + 1) // 2, 128)))
    # Sub-chunk size for the in-kernel loop: multiple of 128 dividing the tile.
    ck = max(128, min((int(chunk) // 128) * 128, tile))
    while tile % ck:
        ck -= 128
    padded_B = _round_up(B, tile)
    n_chunks = padded_B // ck          # total sub-chunks
    cpt = tile // ck                   # sub-chunks per grid step
    num_tiles = padded_B // tile       # grid size

    # Single fused cast + pad + chunked transpose of x (no extra f32 copy).
    # Layout (n_chunks, D_in, ck): batch on the 128-lane axis, D_in on sublanes.
    x_p = jnp.pad(x.astype(compute_dtype), ((0, padded_B - B), (0, 0)))
    xT = x_p.reshape(n_chunks, ck, D_in).transpose(0, 2, 1)

    rep2 = lambda i: (0, 0)   # replicated weights/biases: same block every step

    out = pl.pallas_call(
        _mlp_kernel,
        out_shape=jax.ShapeDtypeStruct((n_chunks, 1, ck), jnp.float32),
        grid_spec=pl.GridSpec(
            grid=(num_tiles,),
            in_specs=[
                pl.BlockSpec((cpt, D_in, ck), lambda i: (i, 0, 0)),  # x tile
                pl.BlockSpec((H1, D_in), rep2),   # W1' (BN folded)
                pl.BlockSpec((H1, 1), rep2),      # c1
                pl.BlockSpec((H2, H1), rep2),     # W2' (BN folded)
                pl.BlockSpec((H2, 1), rep2),      # c2
                pl.BlockSpec((1, H2), rep2),      # w3^T
                pl.BlockSpec((1, 1), rep2),       # b3
            ],
            out_specs=pl.BlockSpec((cpt, 1, ck), lambda i: (i, 0, 0)),
        ),
        compiler_params=pltpu.CompilerParams(
            dimension_semantics=("parallel",)),
    )(xT, w1t, c1, w2t, c2, w3t, b3)

    return out.reshape(padded_B)[:B]   # drop padding, squeeze(-1)


def init_params(key, input_dim, hidden_dims=(64, 32)):
    """Deterministic synthetic parameters (same shapes as the PyTorch module)."""
    h1, h2 = hidden_dims
    ks = jax.random.split(key, 6)
    return {
        # nn.Linear weights stored transposed: (in, out)
        "w1": jax.random.normal(ks[0], (input_dim, h1), jnp.float32) * 0.1,
        "b1": jax.random.normal(ks[1], (h1,), jnp.float32) * 0.01,
        "w2": jax.random.normal(ks[2], (h1, h2), jnp.float32) * 0.1,
        "b2": jax.random.normal(ks[3], (h2,), jnp.float32) * 0.01,
        "w3": jax.random.normal(ks[4], (h2, 1), jnp.float32) * 0.1,
        "b3": jax.random.normal(ks[5], (1,), jnp.float32) * 0.01,
        # BatchNorm1d params / running stats (PyTorch default init values)
        "bn1_gamma": jnp.ones((h1,), jnp.float32),
        "bn1_beta": jnp.zeros((h1,), jnp.float32),
        "bn1_mean": jnp.zeros((h1,), jnp.float32),
        "bn1_var": jnp.ones((h1,), jnp.float32),
        "bn2_gamma": jnp.ones((h2,), jnp.float32),
        "bn2_beta": jnp.zeros((h2,), jnp.float32),
        "bn2_mean": jnp.zeros((h2,), jnp.float32),
        "bn2_var": jnp.ones((h2,), jnp.float32),
    }


def _reference_forward(x, params):
    """Pure-JAX reference (eval-mode, un-folded BN)."""
    eps = 1e-5
    s1 = params["bn1_gamma"] / jnp.sqrt(params["bn1_var"] + eps)
    t1 = params["bn1_beta"] - params["bn1_mean"] * s1
    s2 = params["bn2_gamma"] / jnp.sqrt(params["bn2_var"] + eps)
    t2 = params["bn2_beta"] - params["bn2_mean"] * s2
    h1 = jnp.maximum((x @ params["w1"] + params["b1"]) * s1 + t1, 0.0)
    h2 = jnp.maximum((h1 @ params["w2"] + params["b2"]) * s2 + t2, 0.0)
    return (h2 @ params["w3"] + params["b3"]).squeeze(-1)


if __name__ == "__main__":
    key = jax.random.PRNGKey(0)
    k_x1, k_x2, k_p = jax.random.split(key, 3)

    input_dim = 8            # number of signals
    hidden_dims = (64, 32)
    params = init_params(k_p, input_dim, hidden_dims)

    # TODO(synk): training-mode stochastic Dropout and batch-statistics BatchNorm
    # are intentionally not modeled (eval-mode forward only).

    # --- small batch (single grid step, single sub-chunk) --------------------
    x_small = jax.random.normal(k_x1, (16, input_dim), jnp.float32)
    y_ref_s = _reference_forward(x_small, params)

    y_f32 = jax.block_until_ready(
        signal_combiner_forward(x_small, params, compute_dtype=jnp.float32))
    assert y_f32.shape == (16,)
    assert jnp.allclose(y_f32, y_ref_s, atol=1e-5, rtol=1e-5), "f32 mismatch (small)"

    y_bf16 = jax.block_until_ready(signal_combiner_forward(x_small, params))
    assert jnp.allclose(y_bf16, y_ref_s, atol=5e-2, rtol=5e-2), "bf16 mismatch (small)"

    # --- larger batch: exercises 2 grid steps x 3 sub-chunks of 512 lanes ----
    x_big = jax.random.normal(k_x2, (3000, input_dim), jnp.float32)
    y_ref_b = _reference_forward(x_big, params)

    y_big_f32 = jax.block_until_ready(
        signal_combiner_forward(x_big, params, compute_dtype=jnp.float32))
    assert y_big_f32.shape == (3000,)
    assert jnp.allclose(y_big_f32, y_ref_b, atol=1e-4, rtol=1e-4), "f32 mismatch (big)"

    y_big_bf16 = jax.block_until_ready(signal_combiner_forward(x_big, params))
    assert jnp.allclose(y_big_bf16, y_ref_b, atol=1e-1, rtol=1e-1), "bf16 mismatch (big)"

    print("KERNEL_OK")
</pallas_src>

<mosaic_0001>
module attributes {stable_mosaic.version = 11 : i64} {
  func.func @_mlp_kernel(%arg0: i32, %arg1: memref<1x8x128xf32, #tpu.memory_space<vmem>>, %arg2: memref<64x8xf32, #tpu.memory_space<vmem>>, %arg3: memref<64x1xf32, #tpu.memory_space<vmem>>, %arg4: memref<32x64xf32, #tpu.memory_space<vmem>>, %arg5: memref<32x1xf32, #tpu.memory_space<vmem>>, %arg6: memref<1x32xf32, #tpu.memory_space<vmem>>, %arg7: memref<1x1xf32, #tpu.memory_space<vmem>>, %arg8: memref<1x1x128xf32, #tpu.memory_space<vmem>>) attributes {dimension_semantics = [#tpu.dimension_semantics<parallel>], iteration_bounds = array<i64: 1>, scalar_prefetch = 0 : i64, scratch_operands = 0 : i64, tpu.core_type = #tpu.core_type<tc>, window_params = [{transform_indices = @transform_0, window_bounds = array<i64: 1, 8, 128>}, {pipeline_mode = #tpu.pipeline_mode<synchronous>, transform_indices = @transform_1, window_bounds = array<i64: 64, 8>}, {pipeline_mode = #tpu.pipeline_mode<synchronous>, transform_indices = @transform_2, window_bounds = array<i64: 64, 1>}, {pipeline_mode = #tpu.pipeline_mode<synchronous>, transform_indices = @transform_3, window_bounds = array<i64: 32, 64>}, {pipeline_mode = #tpu.pipeline_mode<synchronous>, transform_indices = @transform_4, window_bounds = array<i64: 32, 1>}, {pipeline_mode = #tpu.pipeline_mode<synchronous>, transform_indices = @transform_5, window_bounds = array<i64: 1, 32>}, {pipeline_mode = #tpu.pipeline_mode<synchronous>, transform_indices = @transform_6, window_bounds = array<i64: 1, 1>}, {transform_indices = @transform_7, window_bounds = array<i64: 1, 1, 128>}]} {
    %c0 = arith.constant 0 : index
    %c0_0 = arith.constant 0 : index
    %0 = vector.load %arg2[%c0, %c0_0] : memref<64x8xf32, #tpu.memory_space<vmem>>, vector<64x8xf32>
    %c0_1 = arith.constant 0 : index
    %c0_2 = arith.constant 0 : index
    %1 = vector.load %arg4[%c0_1, %c0_2] : memref<32x64xf32, #tpu.memory_space<vmem>>, vector<32x64xf32>
    %c0_3 = arith.constant 0 : index
    %c0_4 = arith.constant 0 : index
    %2 = vector.load %arg6[%c0_3, %c0_4] : memref<1x32xf32, #tpu.memory_space<vmem>>, vector<1x32xf32>
    %c0_5 = arith.constant 0 : index
    %c0_6 = arith.constant 0 : index
    %3 = vector.load %arg3[%c0_5, %c0_6] : memref<64x1xf32, #tpu.memory_space<vmem>>, vector<64x1xf32>
    %c0_7 = arith.constant 0 : index
    %c0_8 = arith.constant 0 : index
    %4 = vector.load %arg5[%c0_7, %c0_8] : memref<32x1xf32, #tpu.memory_space<vmem>>, vector<32x1xf32>
    %c0_9 = arith.constant 0 : index
    %c0_10 = arith.constant 0 : index
    %5 = vector.load %arg7[%c0_9, %c0_10] : memref<1x1xf32, #tpu.memory_space<vmem>>, vector<1x1xf32>
    %c0_11 = arith.constant 0 : index
    %c0_12 = arith.constant 0 : index
    %c0_13 = arith.constant 0 : index
    %6 = vector.load %arg1[%c0_11, %c0_12, %c0_13] : memref<1x8x128xf32, #tpu.memory_space<vmem>>, vector<1x8x128xf32>
    %7 = vector.shape_cast %6 : vector<1x8x128xf32> to vector<8x128xf32>
    %cst = arith.constant dense<0.000000e+00> : vector<64x128xf32>
    %8 = tpu.matmul %0, %7, %cst {dimension_numbers = #tpu.dot_dimension_numbers<[1], [0], [0], [1], [0, 0, 1, 1], [], []>} : vector<64x8xf32>, vector<8x128xf32>, vector<64x128xf32> -> vector<64x128xf32>
    %9 = vector.broadcast %3 : vector<64x1xf32> to vector<64x128xf32>
    %10 = arith.addf %8, %9 : vector<64x128xf32>
    %cst_14 = arith.constant 0.000000e+00 : f32
    %11 = vector.broadcast %cst_14 : f32 to vector<64x128xf32>
    %12 = arith.maximumf %10, %11 : vector<64x128xf32>
    %cst_15 = arith.constant dense<0.000000e+00> : vector<32x128xf32>
    %13 = tpu.matmul %1, %12, %cst_15 {dimension_numbers = #tpu.dot_dimension_numbers<[1], [0], [0], [1], [0, 0, 1, 1], [], []>} : vector<32x64xf32>, vector<64x128xf32>, vector<32x128xf32> -> vector<32x128xf32>
    %14 = vector.broadcast %4 : vector<32x1xf32> to vector<32x128xf32>
    %15 = arith.addf %13, %14 : vector<32x128xf32>
    %cst_16 = arith.constant 0.000000e+00 : f32
    %16 = vector.broadcast %cst_16 : f32 to vector<32x128xf32>
    %17 = arith.maximumf %15, %16 : vector<32x128xf32>
    %cst_17 = arith.constant dense<0.000000e+00> : vector<1x128xf32>
    %18 = tpu.matmul %2, %17, %cst_17 {dimension_numbers = #tpu.dot_dimension_numbers<[1], [0], [0], [1], [0, 0, 1, 1], [], []>} : vector<1x32xf32>, vector<32x128xf32>, vector<1x128xf32> -> vector<1x128xf32>
    %19 = vector.broadcast %5 : vector<1x1xf32> to vector<1x128xf32>
    %20 = arith.addf %18, %19 : vector<1x128xf32>
    %c0_18 = arith.constant 0 : index
    %c0_19 = arith.constant 0 : index
    %c0_20 = arith.constant 0 : index
    %21 = vector.load %arg8[%c0_18, %c0_19, %c0_20] : memref<1x1x128xf32, #tpu.memory_space<vmem>>, vector<1x1x128xf32>
    %22 = vector.shape_cast %21 : vector<1x1x128xf32> to vector<1x128xf32>
    %23 = vector.shape_cast %20 : vector<1x128xf32> to vector<1x1x128xf32>
    tpu.vector_store %arg8[%c0_18, %c0_19, %c0_20], %23 {strides = array<i32>} : memref<1x1x128xf32, #tpu.memory_space<vmem>>, vector<1x1x128xf32>,
    return
  }
  func.func @transform_0(%arg0: i32) -> (i32, i32, i32) {
    %c0_i32 = arith.constant 0 : i32
    %c0_i32_0 = arith.constant 0 : i32
    %c0_i32_1 = arith.constant 0 : i32
    return %arg0, %c0_i32, %c0_i32_0 : i32, i32, i32
  }
  func.func @transform_1(%arg0: i32) -> (i32, i32) {
    %c0_i32 = arith.constant 0 : i32
    %c0_i32_0 = arith.constant 0 : i32
    %c0_i32_1 = arith.constant 0 : i32
    return %c0_i32, %c0_i32_0 : i32, i32
  }
  func.func @transform_2(%arg0: i32) -> (i32, i32) {
    %c0_i32 = arith.constant 0 : i32
    %c0_i32_0 = arith.constant 0 : i32
    %c0_i32_1 = arith.constant 0 : i32
    return %c0_i32, %c0_i32_0 : i32, i32
  }
  func.func @transform_3(%arg0: i32) -> (i32, i32) {
    %c0_i32 = arith.constant 0 : i32
    %c0_i32_0 = arith.constant 0 : i32
    %c0_i32_1 = arith.constant 0 : i32
    return %c0_i32, %c0_i32_0 : i32, i32
  }
  func.func @transform_4(%arg0: i32) -> (i32, i32) {
    %c0_i32 = arith.constant 0 : i32
    %c0_i32_0 = arith.constant 0 : i32
    %c0_i32_1 = arith.constant 0 : i32
    return %c0_i32, %c0_i32_0 : i32, i32
  }
  func.func @transform_5(%arg0: i32) -> (i32, i32) {
    %c0_i32 = arith.constant 0 : i32
    %c0_i32_0 = arith.constant 0 : i32
    %c0_i32_1 = arith.constant 0 : i32
    return %c0_i32, %c0_i32_0 : i32, i32
  }
  func.func @transform_6(%arg0: i32) -> (i32, i32) {
    %c0_i32 = arith.constant 0 : i32
    %c0_i32_0 = arith.constant 0 : i32
    %c0_i32_1 = arith.constant 0 : i32
    return %c0_i32, %c0_i32_0 : i32, i32
  }
  func.func @transform_7(%arg0: i32) -> (i32, i32, i32) {
    %c0_i32 = arith.constant 0 : i32
    %c0_i32_0 = arith.constant 0 : i32
    %c0_i32_1 = arith.constant 0 : i32
    return %arg0, %c0_i32, %c0_i32_0 : i32, i32, i32
  }
}

</mosaic_0001>

<llo_original>
// kernel: tpu_custom_call.1
$region0: #{tpu_custom_call.1}
  #allocation0 [shape = 'u32[]', space=smem, size = 0x4, offset = 0x4, fixed_abs, tag = 'smem constant byte address 0x4 - core index']
  #allocation1 [shape = 'u32[144,128]{1,0:T(1,128)}', space=vmem, size = 0x12000, scoped, tag = 'internal scratch']
  #allocation2 [shape = 'f32[1,1]{1,0:T(1,128)S(1)}', space=vmem, size = 0x200, scoped, tag = 'scoped memory for tpu_custom_call.1']
  %s0 = inlined_call_operand.vmem [shape: f32[1,8,128], index: 0, kind: input, shape index: {}]
  %s1 = inlined_call_operand.vmem [shape: f32[64,8], index: 1, kind: input, shape index: {}]
  %s2 = inlined_call_operand.vmem [shape: f32[64,1], index: 2, kind: input, shape index: {}]
  %s3 = inlined_call_operand.vmem [shape: f32[32,64], index: 3, kind: input, shape index: {}]
  %s4 = inlined_call_operand.vmem [shape: f32[32,1], index: 4, kind: input, shape index: {}]
  %s5 = inlined_call_operand.vmem [shape: f32[1,32], index: 5, kind: input, shape index: {}]
  %s6 = inlined_call_operand.<no memory space> [shape: f32[1,1], index: 6, kind: input, shape index: {}]
  %s7 = inlined_call_operand.hbm [shape: f32[1,1,128], index: 7, kind: output, shape index: {}]
  %s8 = sld [smem:[#allocation0]]
  $region38: #{tpu_custom_call.1} parent=0
    _
  %s10 = ssub.s32 1, %s8
  %s11 = scalar_select 0, %s10, %s8
  %v12 = vstv %s6
  %13 = vst [vmem:[#allocation2] sm:$0x1] %v12
  $region1: #{tpu_custom_call.1} parent=0
    #allocation3 [shape = 'u8[512]{0}', space=vmem, size = 0x400, scoped, tag = 'output window, operand 0, single buffered']
    #allocation4 [shape = 's32[1]{0}', space=sflag, size = 0x4, scoped, tag = 'scoped memory for tpu_custom_call.1']
    %14 = vsyncpa [#allocation4], 0
    // Predicated region
    $region2: #{tpu_custom_call.1} parent=1 // pred_check
      _
    $region3: #{tpu_custom_call.1} parent=1 // pred_check_branch
      %16 = sbr.rel (0) target = $region5
    $region4: #{tpu_custom_call.1} parent=1 // pred_region
      _
    $region5: #{tpu_custom_call.1} parent=1 // pred_fallthru
      _
    // Predicated region
    $region6: #{tpu_custom_call.1} parent=1 // pred_check
      _
    $region7: #{tpu_custom_call.1} parent=1 // pred_check_branch
      %18 = sbr.rel (0) target = $region9
    $region8: #{tpu_custom_call.1} parent=1 // pred_region
      _
    $region9: #{tpu_custom_call.1} parent=1 // pred_fallthru
      _
    // Predicated region
    $region10: #{tpu_custom_call.1} parent=1 // pred_check
      _
    $region11: #{tpu_custom_call.1} parent=1 // pred_check_branch
      %20 = sbr.rel (0) target = $region13
    $region12: #{tpu_custom_call.1} parent=1 // pred_region
      _
    $region13: #{tpu_custom_call.1} parent=1 // pred_fallthru
      _
    // Predicated region
    $region14: #{tpu_custom_call.1} parent=1 // pred_check
      _
    $region15: #{tpu_custom_call.1} parent=1 // pred_check_branch
      %22 = sbr.rel (0) target = $region17
    $region16: #{tpu_custom_call.1} parent=1 // pred_region
      _
    $region17: #{tpu_custom_call.1} parent=1 // pred_fallthru
      _
    // Predicated region
    $region18: #{tpu_custom_call.1} parent=1 // pred_check
      _
    $region19: #{tpu_custom_call.1} parent=1 // pred_check_branch
      %24 = sbr.rel (0) target = $region21
    $region20: #{tpu_custom_call.1} parent=1 // pred_region
      _
    $region21: #{tpu_custom_call.1} parent=1 // pred_fallthru
      _
    // Predicated region
    $region22: #{tpu_custom_call.1} parent=1 // pred_check
      _
    $region23: #{tpu_custom_call.1} parent=1 // pred_check_branch
      %26 = sbr.rel (0) target = $region25
    $region24: #{tpu_custom_call.1} parent=1 // pred_region
      _
    $region25: #{tpu_custom_call.1} parent=1 // pred_fallthru
      _
    // Predicated region
    $region26: #{tpu_custom_call.1} parent=1 // pred_check
      _
    $region27: #{tpu_custom_call.1} parent=1 // pred_check_branch
      %28 = sbr.rel (0) target = $region29
    $region28: #{tpu_custom_call.1} parent=1 // pred_region
      _
    $region29: #{tpu_custom_call.1} parent=1 // pred_fallthru
      _
    %v29 = vld [vmem:[%s1] sm:$0xff]
    %v30 = vld [vmem:[%s1 + $0x8] sm:$0xff]
    %v31 = vld [vmem:[%s1 + $0x10] sm:$0xff]
    %v32 = vld [vmem:[%s1 + $0x18] sm:$0xff]
    %v33 = vld [vmem:[%s1 + $0x20] sm:$0xff]
    %v34 = vld [vmem:[%s1 + $0x28] sm:$0xff]
    %v35 = vld [vmem:[%s1 + $0x30] sm:$0xff]
    %v36 = vld [vmem:[%s1 + $0x38] sm:$0xff]
    %v37 = vld [vmem:[%s3] sm:$0xff]
    %v38 = vld [vmem:[%s3 + $0x8] sm:$0xff]
    %v39 = vld [vmem:[%s3 + $0x10] sm:$0xff]
    %v40 = vld [vmem:[%s3 + $0x18] sm:$0xff]
    %v41 = vld [vmem:[%s5] sm:$0x1]
    %v42 = vld [vmem:[%s2] sm:$0xff]
    %v43 = vld [vmem:[%s2 + $0x8] sm:$0xff]
    %v44 = vld [vmem:[%s2 + $0x10] sm:$0xff]
    %v45 = vld [vmem:[%s2 + $0x18] sm:$0xff]
    %v46 = vld [vmem:[%s2 + $0x20] sm:$0xff]
    %v47 = vld [vmem:[%s2 + $0x28] sm:$0xff]
    %v48 = vld [vmem:[%s2 + $0x30] sm:$0xff]
    %v49 = vld [vmem:[%s2 + $0x38] sm:$0xff]
    %v50 = vld [vmem:[%s4] sm:$0xff]
    %v51 = vld [vmem:[%s4 + $0x8] sm:$0xff]
    %v52 = vld [vmem:[%s4 + $0x10] sm:$0xff]
    %v53 = vld [vmem:[%s4 + $0x18] sm:$0xff]
    %v54 = vld [vmem:[#allocation2] sm:$0x1]
    %v55 = vld [vmem:[%s0] sm:$0xff]
    %57 = vset.pattern.permute.xlu0 0
    %58 = vperm.xlu0 %57, %v42
    %v59 = vpop.permute.xlu0 %58
    %62 = vset.pattern.permute.xlu0 0
    %63 = vperm.xlu0 %62, %v43
    %v64 = vpop.permute.xlu0 %63
    %67 = vset.pattern.permute.xlu0 0
    %68 = vperm.xlu0 %67, %v44
    %v69 = vpop.permute.xlu0 %68
    %72 = vset.pattern.permute.xlu0 0
    %73 = vperm.xlu0 %72, %v45
    %v74 = vpop.permute.xlu0 %73
    %77 = vset.pattern.permute.xlu0 0
    %78 = vperm.xlu0 %77, %v46
    %v79 = vpop.permute.xlu0 %78
    %82 = vset.pattern.permute.xlu0 0
    %83 = vperm.xlu0 %82, %v47
    %v84 = vpop.permute.xlu0 %83
    %87 = vset.pattern.permute.xlu0 0
    %88 = vperm.xlu0 %87, %v48
    %v89 = vpop.permute.xlu0 %88
    %92 = vset.pattern.permute.xlu0 0
    %93 = vperm.xlu0 %92, %v49
    %v94 = vpop.permute.xlu0 %93
    %vm96 = vcmask 64512
    %v98 = vsel %vm96, %v29, 0
    %v101 = vsel %vm96, %v30, 0
    %v104 = vsel %vm96, %v31, 0
    %v107 = vsel %vm96, %v32, 0
    %v110 = vsel %vm96, %v33, 0
    %v113 = vsel %vm96, %v34, 0
    %v116 = vsel %vm96, %v35, 0
    %v119 = vsel %vm96, %v36, 0
    %121 = vmatprep.subr.mxu0 0.0
    %122 = vmatpush1.msra.mxu0 %v55
    %123 = vmatprep.subr.mxu0 0.0
    %124 = vmatpush1.msra.mxu0 0.0
    %125 = vmatprep.subr.mxu0 0.0
    %126 = vmatpush1.msra.mxu0 0.0
    %127 = vmatprep.subr.mxu0 0.0
    %128 = vmatpush1.msra.mxu0 0.0
    %129 = vmatprep.subr.mxu0 0.0
    %130 = vmatpush1.msra.mxu0 0.0
    %131 = vmatprep.subr.mxu0 0.0
    %132 = vmatpush1.msra.mxu0 0.0
    %133 = vmatprep.subr.mxu0 0.0
    %134 = vmatpush1.msra.mxu0 0.0
    %135 = vmatprep.subr.mxu0 0.0
    %136 = vmatpush1.msra.mxu0 0.0
    %137 = vmatprep.subr.mxu0 0.0
    %138 = vmatpush1.msra.mxu0 0.0
    %139 = vmatprep.subr.mxu0 0.0
    %140 = vmatpush1.msra.mxu0 0.0
    %141 = vmatprep.subr.mxu0 0.0
    %142 = vmatpush1.msra.mxu0 0.0
    %143 = vmatprep.subr.mxu0 0.0
    %144 = vmatpush1.msra.mxu0 0.0
    %145 = vmatprep.subr.mxu0 0.0
    %146 = vmatpush1.msra.mxu0 0.0
    %147 = vmatprep.subr.mxu0 0.0
    %148 = vmatpush1.msra.mxu0 0.0
    %149 = vmatprep.subr.mxu0 0.0
    %150 = vmatpush1.msra.mxu0 0.0
    %151 = vmatprep.subr.mxu0 0.0
    %152 = vmatpush1.msra.mxu0 0.0
    %153 = vmatprep.subr.mxu0 0.0
    %154 = vmatpush1.msra.mxu0 0.0
    %155 = vmatprep.subr.mxu0 0.0
    %156 = vmatpush1.msra.mxu0 0.0
    %157 = vmatprep.subr.mxu0 0.0
    %158 = vmatpush1.msra.mxu0 0.0
    %159 = vmatprep.subr.mxu0 0.0
    %160 = vmatpush1.msra.mxu0 0.0
    %161 = vmatprep.subr.mxu0 0.0
    %162 = vmatpush1.msra.mxu0 0.0
    %163 = vmatprep.subr.mxu0 0.0
    %164 = vmatpush1.msra.mxu0 0.0
    %165 = vmatprep.subr.mxu0 0.0
    %166 = vmatpush1.msra.mxu0 0.0
    %167 = vmatprep.subr.mxu0 0.0
    %168 = vmatpush1.msra.mxu0 0.0
    %169 = vmatprep.subr.mxu0 0.0
    %170 = vmatpush1.msra.mxu0 0.0
    %171 = vmatprep.subr.mxu0 0.0
    %172 = vmatpush1.msra.mxu0 0.0
    %173 = vmatprep.subr.mxu0 0.0
    %174 = vmatpush1.msra.mxu0 0.0
    %175 = vmatprep.subr.mxu0 0.0
    %176 = vmatpush1.msra.mxu0 0.0
    %177 = vmatprep.subr.mxu0 0.0
    %178 = vmatpush1.msra.mxu0 0.0
    %179 = vmatprep.subr.mxu0 0.0
    %180 = vmatpush1.msra.mxu0 0.0
    %181 = vmatprep.subr.mxu0 0.0
    %182 = vmatpush1.msra.mxu0 0.0
    %183 = vmatprep.subr.mxu0 0.0
    %184 = vmatpush1.msra.mxu0 0.0
    %185 = vmatprep.mubr.f32.mxu0 0.0
    %186 = vmatmul.mubr.f32.gmra.mrb[0].mxu0 %v98
    %v187 = vpop.f32.mrb[0].mxu0
    %v188 = vadd.f32 %v59, %v187
    %v189 = vpop.f32.mrb[0].mxu0
    %190 = vmatprep.mubr.f32.mxu0 0.0
    %191 = vmatmul.mubr.f32.gmra.mrb[0].mxu0 %v101
    %v192 = vpop.f32.mrb[0].mxu0
    %v193 = vadd.f32 %v64, %v192
    %v194 = vpop.f32.mrb[0].mxu0
    %195 = vmatprep.mubr.f32.mxu0 0.0
    %196 = vmatmul.mubr.f32.gmra.mrb[0].mxu0 %v104
    %v197 = vpop.f32.mrb[0].mxu0
    %v198 = vadd.f32 %v69, %v197
    %v199 = vpop.f32.mrb[0].mxu0
    %200 = vmatprep.mubr.f32.mxu0 0.0
    %201 = vmatmul.mubr.f32.gmra.mrb[0].mxu0 %v107
    %v202 = vpop.f32.mrb[0].mxu0
    %v203 = vadd.f32 %v74, %v202
    %v204 = vpop.f32.mrb[0].mxu0
    %205 = vmatprep.mubr.f32.mxu0 0.0
    %206 = vmatmul.mubr.f32.gmra.mrb[0].mxu0 %v110
    %v207 = vpop.f32.mrb[0].mxu0
    %v208 = vadd.f32 %v79, %v207
    %v209 = vpop.f32.mrb[0].mxu0
    %210 = vmatprep.mubr.f32.mxu0 0.0
    %211 = vmatmul.mubr.f32.gmra.mrb[0].mxu0 %v113
    %v212 = vpop.f32.mrb[0].mxu0
    %v213 = vadd.f32 %v84, %v212
    %v214 = vpop.f32.mrb[0].mxu0
    %215 = vmatprep.mubr.f32.mxu0 0.0
    %216 = vmatmul.mubr.f32.gmra.mrb[0].mxu0 %v116
    %v217 = vpop.f32.mrb[0].mxu0
    %v218 = vadd.f32 %v89, %v217
    %v219 = vpop.f32.mrb[0].mxu0
    %220 = vmatprep.mubr.f32.mxu0 0.0
    %221 = vmatmul.mubr.f32.gmra.mrb[0].mxu0 %v119
    %v222 = vpop.f32.mrb[0].mxu0
    %v223 = vadd.f32 %v94, %v222
    %v224 = vpop.f32.mrb[0].mxu0
    %225 = vdwg.mxu0
    %v226 = vmax.f32 %v188, 0.0
    %v227 = vmax.f32 %v193, 0.0
    %v228 = vmax.f32 %v198, 0.0
    %v229 = vmax.f32 %v203, 0.0
    %v230 = vmax.f32 %v208, 0.0
    %v231 = vmax.f32 %v213, 0.0
    %v232 = vmax.f32 %v218, 0.0
    %v233 = vmax.f32 %v223, 0.0
    %235 = vset.pattern.permute.xlu0 0
    %236 = vperm.xlu0 %235, %v50
    %v237 = vpop.permute.xlu0 %236
    %240 = vset.pattern.permute.xlu0 0
    %241 = vperm.xlu0 %240, %v51
    %v242 = vpop.permute.xlu0 %241
    %245 = vset.pattern.permute.xlu0 0
    %246 = vperm.xlu0 %245, %v52
    %v247 = vpop.permute.xlu0 %246
    %250 = vset.pattern.permute.xlu0 0
    %251 = vperm.xlu0 %250, %v53
    %v252 = vpop.permute.xlu0 %251
    %vm254 = vcmask 523264
    %v256 = vsel %vm254, %v37, 0
    %v259 = vsel %vm254, %v38, 0
    %v262 = vsel %vm254, %v39, 0
    %v265 = vsel %vm254, %v40, 0
    %267 = vmatprep.subr.mxu0 0.0
    %268 = vmatpush1.msra.mxu0 %v226
    %269 = vmatprep.subr.mxu0 0.0
    %270 = vmatpush1.msra.mxu0 %v227
    %271 = vmatprep.subr.mxu0 0.0
    %272 = vmatpush1.msra.mxu0 %v228
    %273 = vmatprep.subr.mxu0 0.0
    %274 = vmatpush1.msra.mxu0 %v229
    %275 = vmatprep.subr.mxu0 0.0
    %276 = vmatpush1.msra.mxu0 %v230
    %277 = vmatprep.subr.mxu0 0.0
    %278 = vmatpush1.msra.mxu0 %v231
    %279 = vmatprep.subr.mxu0 0.0
    %280 = vmatpush1.msra.mxu0 %v232
    %281 = vmatprep.subr.mxu0 0.0
    %282 = vmatpush1.msra.mxu0 %v233
    %283 = vmatprep.subr.mxu0 0.0
    %284 = vmatpush1.msra.mxu0 0.0
    %285 = vmatprep.subr.mxu0 0.0
    %286 = vmatpush1.msra.mxu0 0.0
    %287 = vmatprep.subr.mxu0 0.0
    %288 = vmatpush1.msra.mxu0 0.0
    %289 = vmatprep.subr.mxu0 0.0
    %290 = vmatpush1.msra.mxu0 0.0
    %291 = vmatprep.subr.mxu0 0.0
    %292 = vmatpush1.msra.mxu0 0.0
    %293 = vmatprep.subr.mxu0 0.0
    %294 = vmatpush1.msra.mxu0 0.0
    %295 = vmatprep.subr.mxu0 0.0
    %296 = vmatpush1.msra.mxu0 0.0
    %297 = vmatprep.subr.mxu0 0.0
    %298 = vmatpush1.msra.mxu0 0.0
    %299 = vmatprep.subr.mxu0 0.0
    %300 = vmatpush1.msra.mxu0 0.0
    %301 = vmatprep.subr.mxu0 0.0
    %302 = vmatpush1.msra.mxu0 0.0
    %303 = vmatprep.subr.mxu0 0.0
    %304 = vmatpush1.msra.mxu0 0.0
    %305 = vmatprep.subr.mxu0 0.0
    %306 = vmatpush1.msra.mxu0 0.0
    %307 = vmatprep.subr.mxu0 0.0
    %308 = vmatpush1.msra.mxu0 0.0
    %309 = vmatprep.subr.mxu0 0.0
    %310 = vmatpush1.msra.mxu0 0.0
    %311 = vmatprep.subr.mxu0 0.0
    %312 = vmatpush1.msra.mxu0 0.0
    %313 = vmatprep.subr.mxu0 0.0
    %314 = vmatpush1.msra.mxu0 0.0
    %315 = vmatprep.subr.mxu0 0.0
    %316 = vmatpush1.msra.mxu0 0.0
    %317 = vmatprep.subr.mxu0 0.0
    %318 = vmatpush1.msra.mxu0 0.0
    %319 = vmatprep.subr.mxu0 0.0
    %320 = vmatpush1.msra.mxu0 0.0
    %321 = vmatprep.subr.mxu0 0.0
    %322 = vmatpush1.msra.mxu0 0.0
    %323 = vmatprep.subr.mxu0 0.0
    %324 = vmatpush1.msra.mxu0 0.0
    %325 = vmatprep.subr.mxu0 0.0
    %326 = vmatpush1.msra.mxu0 0.0
    %327 = vmatprep.subr.mxu0 0.0
    %328 = vmatpush1.msra.mxu0 0.0
    %329 = vmatprep.subr.mxu0 0.0
    %330 = vmatpush1.msra.mxu0 0.0
    %331 = vmatprep.mubr.f32.mxu0 0.0
    %332 = vmatmul.mubr.f32.gmra.mrb[0].mxu0 %v256
    %v333 = vpop.f32.mrb[0].mxu0
    %v334 = vadd.f32 %v237, %v333
    %v335 = vpop.f32.mrb[0].mxu0
    %336 = vmatprep.mubr.f32.mxu0 0.0
    %337 = vmatmul.mubr.f32.gmra.mrb[0].mxu0 %v259
    %v338 = vpop.f32.mrb[0].mxu0
    %v339 = vadd.f32 %v242, %v338
    %v340 = vpop.f32.mrb[0].mxu0
    %341 = vmatprep.mubr.f32.mxu0 0.0
    %342 = vmatmul.mubr.f32.gmra.mrb[0].mxu0 %v262
    %v343 = vpop.f32.mrb[0].mxu0
    %v344 = vadd.f32 %v247, %v343
    %v345 = vpop.f32.mrb[0].mxu0
    %346 = vmatprep.mubr.f32.mxu0 0.0
    %347 = vmatmul.mubr.f32.gmra.mrb[0].mxu0 %v265
    %v348 = vpop.f32.mrb[0].mxu0
    %v349 = vadd.f32 %v252, %v348
    %v350 = vpop.f32.mrb[0].mxu0
    %351 = vdwg.mxu0
    %v352 = vmax.f32 %v334, 0.0
    %v353 = vmax.f32 %v339, 0.0
    %v354 = vmax.f32 %v344, 0.0
    %v355 = vmax.f32 %v349, 0.0
    %357 = vset.pattern.permute.xlu0 0
    %358 = vperm.xlu0 %357, %v54
    %v359 = vpop.permute.xlu0 %358
    %v361 = vlaneseq
    %v362 = vshrl.u32 %v361, 7
    %v363 = vsub.s32 0, %v362
    %v364 = vrot.slane %v359, %v363
    %vm365 = vcmask 261120
    %v367 = vsel %vm365, %v41, 0
    %369 = vmatprep.subr.mxu0 0.0
    %370 = vmatpush1.msra.mxu0 %v352
    %371 = vmatprep.subr.mxu0 0.0
    %372 = vmatpush1.msra.mxu0 %v353
    %373 = vmatprep.subr.mxu0 0.0
    %374 = vmatpush1.msra.mxu0 %v354
    %375 = vmatprep.subr.mxu0 0.0
    %376 = vmatpush1.msra.mxu0 %v355
    %377 = vmatprep.subr.mxu0 0.0
    %378 = vmatpush1.msra.mxu0 0.0
    %379 = vmatprep.subr.mxu0 0.0
    %380 = vmatpush1.msra.mxu0 0.0
    %381 = vmatprep.subr.mxu0 0.0
    %382 = vmatpush1.msra.mxu0 0.0
    %383 = vmatprep.subr.mxu0 0.0
    %384 = vmatpush1.msra.mxu0 0.0
    %385 = vmatprep.subr.mxu0 0.0
    %386 = vmatpush1.msra.mxu0 0.0
    %387 = vmatprep.subr.mxu0 0.0
    %388 = vmatpush1.msra.mxu0 0.0
    %389 = vmatprep.subr.mxu0 0.0
    %390 = vmatpush1.msra.mxu0 0.0
    %391 = vmatprep.subr.mxu0 0.0
    %392 = vmatpush1.msra.mxu0 0.0
    %393 = vmatprep.subr.mxu0 0.0
    %394 = vmatpush1.msra.mxu0 0.0
    %395 = vmatprep.subr.mxu0 0.0
    %396 = vmatpush1.msra.mxu0 0.0
    %397 = vmatprep.subr.mxu0 0.0
    %398 = vmatpush1.msra.mxu0 0.0
    %399 = vmatprep.subr.mxu0 0.0
    %400 = vmatpush1.msra.mxu0 0.0
    %401 = vmatprep.subr.mxu0 0.0
    %402 = vmatpush1.msra.mxu0 0.0
    %403 = vmatprep.subr.mxu0 0.0
    %404 = vmatpush1.msra.mxu0 0.0
    %405 = vmatprep.subr.mxu0 0.0
    %406 = vmatpush1.msra.mxu0 0.0
    %407 = vmatprep.subr.mxu0 0.0
    %408 = vmatpush1.msra.mxu0 0.0
    %409 = vmatprep.subr.mxu0 0.0
    %410 = vmatpush1.msra.mxu0 0.0
    %411 = vmatprep.subr.mxu0 0.0
    %412 = vmatpush1.msra.mxu0 0.0
    %413 = vmatprep.subr.mxu0 0.0
    %414 = vmatpush1.msra.mxu0 0.0
    %415 = vmatprep.subr.mxu0 0.0
    %416 = vmatpush1.msra.mxu0 0.0
    %417 = vmatprep.subr.mxu0 0.0
    %418 = vmatpush1.msra.mxu0 0.0
    %419 = vmatprep.subr.mxu0 0.0
    %420 = vmatpush1.msra.mxu0 0.0
    %421 = vmatprep.subr.mxu0 0.0
    %422 = vmatpush1.msra.mxu0 0.0
    %423 = vmatprep.subr.mxu0 0.0
    %424 = vmatpush1.msra.mxu0 0.0
    %425 = vmatprep.subr.mxu0 0.0
    %426 = vmatpush1.msra.mxu0 0.0
    %427 = vmatprep.subr.mxu0 0.0
    %428 = vmatpush1.msra.mxu0 0.0
    %429 = vmatprep.subr.mxu0 0.0
    %430 = vmatpush1.msra.mxu0 0.0
    %431 = vmatprep.subr.mxu0 0.0
    %432 = vmatpush1.msra.mxu0 0.0
    %433 = vmatprep.mubr.f32.mxu0 0.0
    %434 = vmatmul.mubr.f32.gmra.mrb[0].mxu0 %v367
    %v435 = vpop.f32.mrb[0].mxu0
    %v436 = vadd.f32 %v364, %v435
    %v437 = vpop.f32.mrb[0].mxu0
    %438 = vdwg.mxu0
    %439 = vst [vmem:[#allocation3] sm:$0x1] %v436
    // Predicated region
    $region30: #{tpu_custom_call.1} parent=1 // pred_check
      _
    $region31: #{tpu_custom_call.1} parent=1 // pred_check_branch
      %441 = sbr.rel (0) target = $region33
    $region32: #{tpu_custom_call.1} parent=1 // pred_region
      %s443 = ssub.s32 16, 16
      %444 = vsyncadd [#allocation4], %s443
      %s446 = sshll.u32 [#allocation3], 4
      %s447 = int_to_ptr.vmem [resolvable:$true] %s446
      %449 = dma.vmem_to_hbm [thread:$0]  %s447, 16, %s7, [#allocation4]
    $region33: #{tpu_custom_call.1} parent=1 // pred_fallthru
      _
    // Predicated region
    $region34: #{tpu_custom_call.1} parent=1 // pred_check
      _
    $region35: #{tpu_custom_call.1} parent=1 // pred_check_branch
      %451 = sbr.rel (0) target = $region37
    $region36: #{tpu_custom_call.1} parent=1 // pred_region
      %452 = dma.done [#allocation4], 16
    $region37: #{tpu_custom_call.1} parent=1 // pred_fallthru
      _
    %453 = vsyncpa [#allocation4], 1

</llo_original>
